<compile_context>
chip_gen: v5e
topology: v5e:2x2
jax: 0.10.0
libtpu: 0.0.40
codegen_flags: <defaults>
</compile_context>

<pallas_src>
import functools

import jax
import jax.numpy as jnp
from jax.experimental import pallas as pl
from jax.experimental.pallas import tpu as pltpu


def _im2col_t(x, kh, kw, stride, pad):
    """x: (N, C, H, W) -> (N, C*kh*kw, Ho*Wo) (K-major, spatial on the last axis)."""
    N, C, H, W = x.shape
    xp = jnp.pad(x, ((0, 0), (0, 0), (pad, pad), (pad, pad)))
    Ho = (H + 2 * pad - kh) // stride + 1
    Wo = (W + 2 * pad - kw) // stride + 1
    rows = jnp.arange(Ho)[:, None] * stride + jnp.arange(kh)[None, :]   # (Ho, kh)
    cols = jnp.arange(Wo)[:, None] * stride + jnp.arange(kw)[None, :]   # (Wo, kw)
    r = rows[:, None, :, None]      # (Ho, 1, kh, 1)
    c = cols[None, :, None, :]      # (1, Wo, 1, kw)
    p = xp[:, :, r, c]              # (N, C, Ho, Wo, kh, kw)
    p = jnp.transpose(p, (0, 1, 4, 5, 2, 3))   # (N, C, kh, kw, Ho, Wo)
    return p.reshape(N, C * kh * kw, Ho * Wo), Ho, Wo


def _dblock_kernel(p_ref, w_ref, out_ref, *, outc, group, n_spatial):
    # p_ref  : (G, Kpad, P)   bf16  -- columns of K: [main-conv K | mask-conv K | zero pad]
    # w_ref  : (2*outc, Kpad) bf16  -- block-diagonal fused weight
    #           rows [0:outc)       = mask-branch 3x3 conv (cols Kx:Kx+Km)
    #           rows [outc:2*outc)  = main-branch 4x4 conv (cols 0:Kx)
    # out_ref: (G, 2*outc, P) f32
    w = w_ref[...]                       # stays resident across the G loop
    inv_p = 1.0 / n_spatial
    # per-channel eps: mask branch (rows < outc) uses 1e-5, main branch uses 0.8
    row = jax.lax.broadcasted_iota(jnp.int32, (2 * outc, 1), 0)
    eps = jnp.where(row < outc, 1e-5, 0.8).astype(jnp.float32)

    for g in range(group):               # static unrolled loop over the sample group
        # both convs in one MXU call, f32 accumulation (biases dropped: cancelled by IN)
        y = jnp.dot(w, p_ref[g], preferred_element_type=jnp.float32)   # (2*outc, P)

        # single-pass InstanceNorm statistics over the spatial (lane) axis
        s1 = jnp.sum(y, axis=1, keepdims=True)
        s2 = jnp.sum(y * y, axis=1, keepdims=True)
        mu = s1 * inv_p
        var = s2 * inv_p - mu * mu        # biased variance, matches nn.InstanceNorm2d
        yn = (y - mu) * jax.lax.rsqrt(var + eps)

        m_half = yn[:outc]                # mask branch (eps=1e-5)
        f_half = yn[outc:]                # main branch (eps=0.8)
        feature = jnp.maximum(f_half, 0.0)                        # ReLU
        mfeat = jnp.where(m_half >= 0.0, m_half, 0.2 * m_half)    # LeakyReLU(0.2)

        # out = cat(mask_feature * feature, feature) along channels;
        # single full-tile, lane-dense store (P on the lane axis)
        out_ref[g] = jnp.concatenate([mfeat * feature, feature], axis=0)


def _pick_group_size(N, Kpad, P, outc, in_itemsize, budget_bytes=20 * 1024 * 1024):
    # double-buffered input block + double-buffered output block, per sample
    per_sample = 2 * Kpad * P * in_itemsize + 2 * (2 * outc) * P * 4
    g = int(max(1, min(N, budget_bytes // max(per_sample, 1))))
    while N % g:
        g -= 1
    return g
    # TODO(synk): for very large images where even G=1 exceeds the budget (v7x's
    # 64 MiB VMEM), add a P-tiling grid axis with sum/sumsq scratch accumulators
    # and a pl.when finalize pass for the normalization.


def dblock_forward(x, mask, wx, bx, wm, bm, ks, *, compute_dtype=jnp.bfloat16):
    """x: (N, inc, H, W), mask: (N, channels, H, W) -> (N, 2*outc, H//2, W//2).

    bx / bm are accepted for interface parity with the PyTorch module but are
    unused: a per-channel conv bias is exactly cancelled by the InstanceNorm
    mean subtraction that immediately follows each conv (affine=False).
    """
    del bx, bm
    N = x.shape[0]
    Nm, Cm, Hm, Wm = mask.shape
    outc = wx.shape[0]
    Kx = wx.shape[1] * wx.shape[2] * wx.shape[3]   # inc*4*4
    Km = wm.shape[1] * wm.shape[2] * wm.shape[3]   # channels*3*3

    # ---- glue: transposed im2col (K-major, spatial-last). Cast to bf16 BEFORE
    # im2col so the 4x / 9x amplified patch arrays are half-size in HBM. -------
    xp_t, Ho, Wo = _im2col_t(x.astype(compute_dtype), 4, 4, 2, 1)
    mpool = mask.reshape(Nm, Cm, Hm // ks, ks, Wm // ks, ks).mean(axis=(3, 5))
    mp_t, Hmo, Wmo = _im2col_t(mpool.astype(compute_dtype), 3, 3, 1, 1)
    assert (Hmo, Wmo) == (Ho, Wo), "mask branch must match main-branch spatial size"

    P = Ho * Wo
    Kpad = ((Kx + Km + 7) // 8) * 8        # keep K sublane-aligned

    patches = jnp.concatenate(
        [xp_t, mp_t, jnp.zeros((N, Kpad - Kx - Km, P), compute_dtype)], axis=1)

    # block-diagonal fused weight (no biases)
    w = jnp.zeros((2 * outc, Kpad), jnp.float32)
    w = w.at[:outc, Kx:Kx + Km].set(wm.reshape(outc, Km).astype(jnp.float32))
    w = w.at[outc:, :Kx].set(wx.reshape(outc, Kx).astype(jnp.float32))
    w = w.astype(compute_dtype)

    in_itemsize = jnp.dtype(compute_dtype).itemsize
    G = _pick_group_size(N, Kpad, P, outc, in_itemsize)

    out = pl.pallas_call(
        functools.partial(_dblock_kernel, outc=outc, group=G, n_spatial=P),
        out_shape=jax.ShapeDtypeStruct((N, 2 * outc, P), jnp.float32),
        grid_spec=pltpu.PrefetchScalarGridSpec(
            num_scalar_prefetch=0,
            grid=(N // G,),
            in_specs=[
                pl.BlockSpec((G, Kpad, P), lambda n: (n, 0, 0)),
                pl.BlockSpec((2 * outc, Kpad), lambda n: (0, 0)),
            ],
            out_specs=pl.BlockSpec((G, 2 * outc, P), lambda n: (n, 0, 0)),
        ),
        compiler_params=pltpu.CompilerParams(
            dimension_semantics=("parallel",),      # batch groups independent (v7x megacore)
            vmem_limit_bytes=32 * 1024 * 1024,
        ),
    )(patches, w)

    # lane-dense (N, 2*outc, P) -> NCHW is a free reshape (no transpose)
    return out.reshape(N, 2 * outc, Ho, Wo)


if __name__ == "__main__":
    # Dblock(in_size=(channels=3, inc=4, h=16, w=16), outc=8, ks=2,
    #        normalize=True, mask=True, mask_norm=True)
    N, channels, inc, H, W = 2, 3, 4, 16, 16
    outc, ks = 8, 2

    key = jax.random.PRNGKey(0)
    k_wx, k_bx, k_wm, k_bm, k_x, k_m = jax.random.split(key, 6)

    # deterministic parameter init (synthetic; shapes match nn.Conv2d in __init__)
    wx = jax.random.normal(k_wx, (outc, inc, 4, 4), jnp.float32) * 0.1       # Conv2d(inc, outc, 4, 2, 1)
    bx = jax.random.normal(k_bx, (outc,), jnp.float32) * 0.1
    wm = jax.random.normal(k_wm, (outc, channels, 3, 3), jnp.float32) * 0.1  # Conv2d(channels, outc, 3, 1, 1)
    bm = jax.random.normal(k_bm, (outc,), jnp.float32) * 0.1

    x = jax.random.normal(k_x, (N, inc, H, W), jnp.float32)
    mask = jax.random.normal(k_m, (N, channels, H, W), jnp.float32)

    out = dblock_forward(x, mask, wx, bx, wm, bm, ks)
    out = jax.block_until_ready(out)

    assert out.shape == (N, 2 * outc, H // 2, W // 2), out.shape
    assert bool(jnp.all(jnp.isfinite(out)))
    print("KERNEL_OK")
</pallas_src>

<mosaic_0001>
module attributes {stable_mosaic.version = 11 : i64} {
  func.func @_dblock_kernel(%arg0: i32, %arg1: memref<2x96x64xbf16, #tpu.memory_space<vmem>>, %arg2: memref<16x96xbf16, #tpu.memory_space<vmem>>, %arg3: memref<2x16x64xf32, #tpu.memory_space<vmem>>) attributes {dimension_semantics = [#tpu.dimension_semantics<parallel>], iteration_bounds = array<i64: 1>, scalar_prefetch = 0 : i64, scratch_operands = 0 : i64, tpu.core_type = #tpu.core_type<tc>, window_params = [{transform_indices = @transform_0, window_bounds = array<i64: 2, 96, 64>}, {pipeline_mode = #tpu.pipeline_mode<synchronous>, transform_indices = @transform_1, window_bounds = array<i64: 16, 96>}, {transform_indices = @transform_2, window_bounds = array<i64: 2, 16, 64>}]} {
    %c0 = arith.constant 0 : index
    %c0_0 = arith.constant 0 : index
    %0 = vector.load %arg2[%c0, %c0_0] : memref<16x96xbf16, #tpu.memory_space<vmem>>, vector<16x96xbf16>
    %1 = tpu.iota {dimensions = array<i32: 0>} : vector<16x1xi32>
    %c8_i32 = arith.constant 8 : i32
    %2 = vector.broadcast %c8_i32 : i32 to vector<16x1xi32>
    %3 = arith.cmpi slt, %1, %2 : vector<16x1xi32>
    %cst = arith.constant 9.99999974E-6 : f32
    %cst_1 = arith.constant 8.000000e-01 : f32
    %4 = vector.broadcast %cst : f32 to vector<16x1xf32>
    %5 = vector.broadcast %cst_1 : f32 to vector<16x1xf32>
    %6 = arith.select %3, %4, %5 : vector<16x1xi1>, vector<16x1xf32>
    %c0_2 = arith.constant 0 : index
    %c0_3 = arith.constant 0 : index
    %c0_4 = arith.constant 0 : index
    %7 = vector.load %arg1[%c0_2, %c0_3, %c0_4] : memref<2x96x64xbf16, #tpu.memory_space<vmem>>, vector<1x96x64xbf16>
    %8 = vector.shape_cast %7 : vector<1x96x64xbf16> to vector<96x64xbf16>
    %cst_5 = arith.constant dense<0.000000e+00> : vector<16x64xf32>
    %9 = tpu.matmul %0, %8, %cst_5 {dimension_numbers = #tpu.dot_dimension_numbers<[1], [0], [0], [1], [0, 0, 1, 1], [], []>} : vector<16x96xbf16>, vector<96x64xbf16>, vector<16x64xf32> -> vector<16x64xf32>
    %cst_6 = arith.constant dense<0.000000e+00> : vector<16xf32>
    %10 = vector.multi_reduction <add>, %9, %cst_6 [1] : vector<16x64xf32> to vector<16xf32>
    %11 = vector.shape_cast %10 : vector<16xf32> to vector<16x1xf32>
    %12 = arith.mulf %9, %9 : vector<16x64xf32>
    %cst_7 = arith.constant dense<0.000000e+00> : vector<16xf32>
    %13 = vector.multi_reduction <add>, %12, %cst_7 [1] : vector<16x64xf32> to vector<16xf32>
    %14 = vector.shape_cast %13 : vector<16xf32> to vector<16x1xf32>
    %cst_8 = arith.constant 1.562500e-02 : f32
    %15 = vector.broadcast %cst_8 : f32 to vector<16x1xf32>
    %16 = arith.mulf %11, %15 : vector<16x1xf32>
    %cst_9 = arith.constant 1.562500e-02 : f32
    %17 = vector.broadcast %cst_9 : f32 to vector<16x1xf32>
    %18 = arith.mulf %14, %17 : vector<16x1xf32>
    %19 = arith.mulf %16, %16 : vector<16x1xf32>
    %20 = arith.subf %18, %19 : vector<16x1xf32>
    %21 = vector.broadcast %16 : vector<16x1xf32> to vector<16x64xf32>
    %22 = arith.subf %9, %21 : vector<16x64xf32>
    %23 = arith.addf %20, %6 : vector<16x1xf32>
    %24 = math.rsqrt %23 : vector<16x1xf32>
    %25 = vector.broadcast %24 : vector<16x1xf32> to vector<16x64xf32>
    %26 = arith.mulf %22, %25 : vector<16x64xf32>
    %27 = vector.extract_strided_slice %26 {offsets = [0, 0], sizes = [8, 64], strides = [1, 1]} : vector<16x64xf32> to vector<8x64xf32>
    %28 = vector.extract_strided_slice %26 {offsets = [8, 0], sizes = [8, 64], strides = [1, 1]} : vector<16x64xf32> to vector<8x64xf32>
    %cst_10 = arith.constant 0.000000e+00 : f32
    %29 = vector.broadcast %cst_10 : f32 to vector<8x64xf32>
    %30 = arith.maximumf %28, %29 : vector<8x64xf32>
    %cst_11 = arith.constant 0.000000e+00 : f32
    %31 = vector.broadcast %cst_11 : f32 to vector<8x64xf32>
    %32 = arith.cmpf oge, %27, %31 : vector<8x64xf32>
    %cst_12 = arith.constant 2.000000e-01 : f32
    %33 = vector.broadcast %cst_12 : f32 to vector<8x64xf32>
    %34 = arith.mulf %33, %27 : vector<8x64xf32>
    %35 = arith.select %32, %27, %34 : vector<8x64xi1>, vector<8x64xf32>
    %36 = arith.mulf %35, %30 : vector<8x64xf32>
    %37 = tpu.concatenate %36, %30 in 0 : vector<8x64xf32>, vector<8x64xf32> -> vector<16x64xf32>
    %c0_13 = arith.constant 0 : index
    %c0_14 = arith.constant 0 : index
    %c0_15 = arith.constant 0 : index
    %38 = vector.load %arg3[%c0_13, %c0_14, %c0_15] : memref<2x16x64xf32, #tpu.memory_space<vmem>>, vector<1x16x64xf32>
    %39 = vector.shape_cast %38 : vector<1x16x64xf32> to vector<16x64xf32>
    %40 = vector.shape_cast %37 : vector<16x64xf32> to vector<1x16x64xf32>
    tpu.vector_store %arg3[%c0_13, %c0_14, %c0_15], %40 {strides = array<i32>} : memref<2x16x64xf32, #tpu.memory_space<vmem>>, vector<1x16x64xf32>,
    %c1 = arith.constant 1 : index
    %c0_16 = arith.constant 0 : index
    %c0_17 = arith.constant 0 : index
    %41 = vector.load %arg1[%c1, %c0_16, %c0_17] : memref<2x96x64xbf16, #tpu.memory_space<vmem>>, vector<1x96x64xbf16>
    %42 = vector.shape_cast %41 : vector<1x96x64xbf16> to vector<96x64xbf16>
    %cst_18 = arith.constant dense<0.000000e+00> : vector<16x64xf32>
    %43 = tpu.matmul %0, %42, %cst_18 {dimension_numbers = #tpu.dot_dimension_numbers<[1], [0], [0], [1], [0, 0, 1, 1], [], []>} : vector<16x96xbf16>, vector<96x64xbf16>, vector<16x64xf32> -> vector<16x64xf32>
    %cst_19 = arith.constant dense<0.000000e+00> : vector<16xf32>
    %44 = vector.multi_reduction <add>, %43, %cst_19 [1] : vector<16x64xf32> to vector<16xf32>
    %45 = vector.shape_cast %44 : vector<16xf32> to vector<16x1xf32>
    %46 = arith.mulf %43, %43 : vector<16x64xf32>
    %cst_20 = arith.constant dense<0.000000e+00> : vector<16xf32>
    %47 = vector.multi_reduction <add>, %46, %cst_20 [1] : vector<16x64xf32> to vector<16xf32>
    %48 = vector.shape_cast %47 : vector<16xf32> to vector<16x1xf32>
    %cst_21 = arith.constant 1.562500e-02 : f32
    %49 = vector.broadcast %cst_21 : f32 to vector<16x1xf32>
    %50 = arith.mulf %45, %49 : vector<16x1xf32>
    %cst_22 = arith.constant 1.562500e-02 : f32
    %51 = vector.broadcast %cst_22 : f32 to vector<16x1xf32>
    %52 = arith.mulf %48, %51 : vector<16x1xf32>
    %53 = arith.mulf %50, %50 : vector<16x1xf32>
    %54 = arith.subf %52, %53 : vector<16x1xf32>
    %55 = vector.broadcast %50 : vector<16x1xf32> to vector<16x64xf32>
    %56 = arith.subf %43, %55 : vector<16x64xf32>
    %57 = arith.addf %54, %6 : vector<16x1xf32>
    %58 = math.rsqrt %57 : vector<16x1xf32>
    %59 = vector.broadcast %58 : vector<16x1xf32> to vector<16x64xf32>
    %60 = arith.mulf %56, %59 : vector<16x64xf32>
    %61 = vector.extract_strided_slice %60 {offsets = [0, 0], sizes = [8, 64], strides = [1, 1]} : vector<16x64xf32> to vector<8x64xf32>
    %62 = vector.extract_strided_slice %60 {offsets = [8, 0], sizes = [8, 64], strides = [1, 1]} : vector<16x64xf32> to vector<8x64xf32>
    %cst_23 = arith.constant 0.000000e+00 : f32
    %63 = vector.broadcast %cst_23 : f32 to vector<8x64xf32>
    %64 = arith.maximumf %62, %63 : vector<8x64xf32>
    %cst_24 = arith.constant 0.000000e+00 : f32
    %65 = vector.broadcast %cst_24 : f32 to vector<8x64xf32>
    %66 = arith.cmpf oge, %61, %65 : vector<8x64xf32>
    %cst_25 = arith.constant 2.000000e-01 : f32
    %67 = vector.broadcast %cst_25 : f32 to vector<8x64xf32>
    %68 = arith.mulf %67, %61 : vector<8x64xf32>
    %69 = arith.select %66, %61, %68 : vector<8x64xi1>, vector<8x64xf32>
    %70 = arith.mulf %69, %64 : vector<8x64xf32>
    %71 = tpu.concatenate %70, %64 in 0 : vector<8x64xf32>, vector<8x64xf32> -> vector<16x64xf32>
    %c1_26 = arith.constant 1 : index
    %c0_27 = arith.constant 0 : index
    %c0_28 = arith.constant 0 : index
    %72 = vector.load %arg3[%c1_26, %c0_27, %c0_28] : memref<2x16x64xf32, #tpu.memory_space<vmem>>, vector<1x16x64xf32>
    %73 = vector.shape_cast %72 : vector<1x16x64xf32> to vector<16x64xf32>
    %74 = vector.shape_cast %71 : vector<16x64xf32> to vector<1x16x64xf32>
    tpu.vector_store %arg3[%c1_26, %c0_27, %c0_28], %74 {strides = array<i32>} : memref<2x16x64xf32, #tpu.memory_space<vmem>>, vector<1x16x64xf32>,
    return
  }
  func.func @transform_0(%arg0: i32) -> (i32, i32, i32) {
    %c0_i32 = arith.constant 0 : i32
    %c0_i32_0 = arith.constant 0 : i32
    %c0_i32_1 = arith.constant 0 : i32
    return %arg0, %c0_i32, %c0_i32_0 : i32, i32, i32
  }
  func.func @transform_1(%arg0: i32) -> (i32, i32) {
    %c0_i32 = arith.constant 0 : i32
    %c0_i32_0 = arith.constant 0 : i32
    %c0_i32_1 = arith.constant 0 : i32
    return %c0_i32, %c0_i32_0 : i32, i32
  }
  func.func @transform_2(%arg0: i32) -> (i32, i32, i32) {
    %c0_i32 = arith.constant 0 : i32
    %c0_i32_0 = arith.constant 0 : i32
    %c0_i32_1 = arith.constant 0 : i32
    return %arg0, %c0_i32, %c0_i32_0 : i32, i32, i32
  }
}

</mosaic_0001>

<llo_original>
// kernel: tpu_custom_call.1
$region0: #{tpu_custom_call.1}
  #allocation0 [shape = 'u32[]', space=smem, size = 0x4, offset = 0x4, fixed_abs, tag = 'smem constant byte address 0x4 - core index']
  #allocation1 [shape = 'u32[72,128]{1,0:T(1,128)}', space=vmem, size = 0x9000, scoped, tag = 'internal scratch']
  %s0 = inlined_call_operand.vmem [shape: bf16[2,96,64], index: 0, kind: input, shape index: {}]
  %s1 = inlined_call_operand.vmem [shape: bf16[16,96], index: 1, kind: input, shape index: {}]
  %s2 = inlined_call_operand.hbm [shape: f32[2,16,64], index: 2, kind: output, shape index: {}]
  %s3 = sld [smem:[#allocation0]]
  $region18: #{tpu_custom_call.1} parent=0
    _
  %s5 = ssub.s32 1, %s3
  %s6 = scalar_select 0, %s5, %s3
  $region1: #{tpu_custom_call.1} parent=0
    #allocation2 [shape = 'u8[16384]{0}', space=vmem, size = 0x4000, scoped, tag = 'output window, operand 0, single buffered']
    #allocation3 [shape = 's32[1]{0}', space=sflag, size = 0x4, scoped, tag = 'scoped memory for tpu_custom_call.1']
    %7 = vsyncpa [#allocation3], 0
    // Predicated region
    $region2: #{tpu_custom_call.1} parent=1 // pred_check
      _
    $region3: #{tpu_custom_call.1} parent=1 // pred_check_branch
      %9 = sbr.rel (0) target = $region5
    $region4: #{tpu_custom_call.1} parent=1 // pred_region
      _
    $region5: #{tpu_custom_call.1} parent=1 // pred_fallthru
      _
    // Predicated region
    $region6: #{tpu_custom_call.1} parent=1 // pred_check
      _
    $region7: #{tpu_custom_call.1} parent=1 // pred_check_branch
      %11 = sbr.rel (0) target = $region9
    $region8: #{tpu_custom_call.1} parent=1 // pred_region
      _
    $region9: #{tpu_custom_call.1} parent=1 // pred_fallthru
      _
    %v13 = vld [vmem:[%s1] sm:$0xf]
    %v14 = vld [vmem:[%s1 + $0x4] sm:$0xf]
    %v15 = vlaneseq
    %v16 = vshrl.u32 %v15, 7
    %v17 = vadd.s32 %v16, 8
    %vm18 = vcmp.lt.s32.totalorder %v16, 8
    %vm19 = vcmp.lt.s32.totalorder %v17, 8
    %v20 = vsel %vm18, 1e-05, 0.8
    %v21 = vsel %vm19, 1e-05, 0.8
    %v22 = vld [vmem:[%s0] sm:$0xf]
    %v23 = vld [vmem:[%s0 + $0x4] sm:$0xf]
    %v24 = vld [vmem:[%s0 + $0x8] sm:$0xf]
    %v25 = vld [vmem:[%s0 + $0xc] sm:$0xf]
    %v26 = vld [vmem:[%s0 + $0x10] sm:$0xf]
    %v27 = vld [vmem:[%s0 + $0x14] sm:$0xf]
    %v28 = vld [vmem:[%s0 + $0x18] sm:$0xf]
    %v29 = vld [vmem:[%s0 + $0x1c] sm:$0xf]
    %v30 = vld [vmem:[%s0 + $0x20] sm:$0xf]
    %v31 = vld [vmem:[%s0 + $0x24] sm:$0xf]
    %v32 = vld [vmem:[%s0 + $0x28] sm:$0xf]
    %v33 = vld [vmem:[%s0 + $0x2c] sm:$0xf]
    %v36 = vunpack.c.l.b16 %v13
    %v37 = vunpack.c.l.b16 %v14
    %v38 = vpack.c.b16 %v37, %v36
    %v51 = vunpack.c.l.b16 %v22
    %v52 = vunpack.c.l.b16 %v23
    %v53 = vunpack.c.l.b16 %v24
    %v54 = vunpack.c.l.b16 %v25
    %v55 = vunpack.c.l.b16 %v26
    %v56 = vunpack.c.l.b16 %v27
    %v57 = vunpack.c.l.b16 %v28
    %v58 = vunpack.c.l.b16 %v29
    %v59 = vunpack.c.l.b16 %v30
    %v60 = vunpack.c.l.b16 %v31
    %v61 = vunpack.c.l.b16 %v32
    %v62 = vunpack.c.l.b16 %v33
    %v63 = vpack.c.b16 %v52, %v51
    %v64 = vpack.c.b16 %v54, %v53
    %v65 = vpack.c.b16 %v56, %v55
    %v66 = vpack.c.b16 %v58, %v57
    %v67 = vpack.c.b16 %v60, %v59
    %v68 = vpack.c.b16 %v62, %v61
    %vm75 = vcmask 785408
    %v77 = vsel %vm75, %v38, 0
    %79 = vmatpush.bf16.msra.mxu0 0
    %80 = vmatpush.bf16.msra.mxu0 0
    %81 = vmatpush.bf16.msra.mxu0 %v68
    %82 = vmatpush.bf16.msra.mxu0 %v67
    %83 = vmatpush.bf16.msra.mxu0 %v66
    %84 = vmatpush.bf16.msra.mxu0 %v65
    %85 = vmatpush.bf16.msra.mxu0 %v64
    %86 = vmatpush.bf16.msra.mxu0 %v63
    %87 = vmatmul.bf16.gmra.mxu0 %v77
    %v88 = vpop.f32.mrf.mxu0
    %v89 = vadd.f32 0.0, %v88
    %v90 = vpop.f32.mrf.mxu0
    %v91 = vadd.f32 0.0, %v90
    %92 = vdwg.mxu0
    %vm93 = vcmask 523264
    %v94 = vsel %vm93, %v89, 0.0
    %95 = vadd.xlane.f32.xlu0 %v94
    %v96 = vpop.xlane.xlu0 %95
    %v97 = vsel %vm93, %v91, 0.0
    %98 = vadd.xlane.f32.xlu0 %v97
    %v99 = vpop.xlane.xlu0 %98
    %v100 = vmul.f32 %v89, %v89
    %v101 = vmul.f32 %v91, %v91
    %v102 = vsel %vm93, %v100, 0.0
    %103 = vadd.xlane.f32.xlu0 %v102
    %v104 = vpop.xlane.xlu0 %103
    %v105 = vsel %vm93, %v101, 0.0
    %106 = vadd.xlane.f32.xlu0 %v105
    %v107 = vpop.xlane.xlu0 %106
    %v108 = vmul.f32 %v96, 0.015625
    %v109 = vmul.f32 %v99, 0.015625
    %v110 = vmul.f32 %v104, 0.015625
    %v111 = vmul.f32 %v107, 0.015625
    %v112 = vmul.f32 %v108, %v108
    %v113 = vmul.f32 %v109, %v109
    %v114 = vsub.f32 %v110, %v112
    %v115 = vsub.f32 %v111, %v113
    %v116 = vsub.f32 %v89, %v108
    %v117 = vsub.f32 %v91, %v109
    %v118 = vadd.f32 %v114, %v20
    %v119 = vadd.f32 %v115, %v21
    %v120 = vrsqrt.pop %v118
    %v121 = vmul.f32 %v120, %v118
    %v122 = vmul.f32 %v121, %v120
    %v123 = vmul.f32 0.5, %v122
    %v124 = vsub.f32 1.5, %v123
    %v125 = vmul.f32 %v120, %v124
    %vm126 = vweird.f32 %v118
    %vm127 = vweird.f32 %v120
    %vm128 = vmor %vm126, %vm127
    %v129 = vsel %vm128, %v120, %v125
    %v130 = vrsqrt.pop %v119
    %v131 = vmul.f32 %v130, %v119
    %v132 = vmul.f32 %v131, %v130
    %v133 = vmul.f32 0.5, %v132
    %v134 = vsub.f32 1.5, %v133
    %v135 = vmul.f32 %v130, %v134
    %vm136 = vweird.f32 %v119
    %vm137 = vweird.f32 %v130
    %vm138 = vmor %vm136, %vm137
    %v139 = vsel %vm138, %v130, %v135
    %v140 = vmul.f32 %v116, %v129
    %v141 = vmul.f32 %v117, %v139
    %v142 = vmax.f32 %v141, 0.0
    %vm143 = vcmp.ge.f32.partialorder %v140, 0.0
    %v144 = vmul.f32 %v140, 0.2
    %v145 = vsel %vm143, %v140, %v144
    %v146 = vmul.f32 %v145, %v142
    %147 = vst.msk [vmem:[#allocation2] sm:$0xff] %vm93, %v146
    %148 = vst.msk [vmem:[#allocation2 + $0x8] sm:$0xff] %vm93, %v142
    %s149 = scalar_lea.vmem %s0, 48
    %v150 = vld [vmem:[%s149] sm:$0xf]
    %v151 = vld [vmem:[%s149 + $0x4] sm:$0xf]
    %v152 = vld [vmem:[%s149 + $0x8] sm:$0xf]
    %v153 = vld [vmem:[%s149 + $0xc] sm:$0xf]
    %v154 = vld [vmem:[%s149 + $0x10] sm:$0xf]
    %v155 = vld [vmem:[%s149 + $0x14] sm:$0xf]
    %v156 = vld [vmem:[%s149 + $0x18] sm:$0xf]
    %v157 = vld [vmem:[%s149 + $0x1c] sm:$0xf]
    %v158 = vld [vmem:[%s149 + $0x20] sm:$0xf]
    %v159 = vld [vmem:[%s149 + $0x24] sm:$0xf]
    %v160 = vld [vmem:[%s149 + $0x28] sm:$0xf]
    %v161 = vld [vmem:[%s149 + $0x2c] sm:$0xf]
    %v174 = vunpack.c.l.b16 %v150
    %v175 = vunpack.c.l.b16 %v151
    %v176 = vunpack.c.l.b16 %v152
    %v177 = vunpack.c.l.b16 %v153
    %v178 = vunpack.c.l.b16 %v154
    %v179 = vunpack.c.l.b16 %v155
    %v180 = vunpack.c.l.b16 %v156
    %v181 = vunpack.c.l.b16 %v157
    %v182 = vunpack.c.l.b16 %v158
    %v183 = vunpack.c.l.b16 %v159
    %v184 = vunpack.c.l.b16 %v160
    %v185 = vunpack.c.l.b16 %v161
    %v186 = vpack.c.b16 %v175, %v174
    %v187 = vpack.c.b16 %v177, %v176
    %v188 = vpack.c.b16 %v179, %v178
    %v189 = vpack.c.b16 %v181, %v180
    %v190 = vpack.c.b16 %v183, %v182
    %v191 = vpack.c.b16 %v185, %v184
    %198 = vmatpush.bf16.msra.mxu0 0
    %199 = vmatpush.bf16.msra.mxu0 0
    %200 = vmatpush.bf16.msra.mxu0 %v191
    %201 = vmatpush.bf16.msra.mxu0 %v190
    %202 = vmatpush.bf16.msra.mxu0 %v189
    %203 = vmatpush.bf16.msra.mxu0 %v188
    %204 = vmatpush.bf16.msra.mxu0 %v187
    %205 = vmatpush.bf16.msra.mxu0 %v186
    %206 = vmatmul.bf16.gmra.mxu0 %v77
    %v207 = vpop.f32.mrf.mxu0
    %v208 = vadd.f32 0.0, %v207
    %v209 = vpop.f32.mrf.mxu0
    %v210 = vadd.f32 0.0, %v209
    %211 = vdwg.mxu0
    %v212 = vsel %vm93, %v208, 0.0
    %213 = vadd.xlane.f32.xlu0 %v212
    %v214 = vpop.xlane.xlu0 %213
    %v215 = vsel %vm93, %v210, 0.0
    %216 = vadd.xlane.f32.xlu0 %v215
    %v217 = vpop.xlane.xlu0 %216
    %v218 = vmul.f32 %v208, %v208
    %v219 = vmul.f32 %v210, %v210
    %v220 = vsel %vm93, %v218, 0.0
    %221 = vadd.xlane.f32.xlu0 %v220
    %v222 = vpop.xlane.xlu0 %221
    %v223 = vsel %vm93, %v219, 0.0
    %224 = vadd.xlane.f32.xlu0 %v223
    %v225 = vpop.xlane.xlu0 %224
    %v226 = vmul.f32 %v214, 0.015625
    %v227 = vmul.f32 %v217, 0.015625
    %v228 = vmul.f32 %v222, 0.015625
    %v229 = vmul.f32 %v225, 0.015625
    %v230 = vmul.f32 %v226, %v226
    %v231 = vmul.f32 %v227, %v227
    %v232 = vsub.f32 %v228, %v230
    %v233 = vsub.f32 %v229, %v231
    %v234 = vsub.f32 %v208, %v226
    %v235 = vsub.f32 %v210, %v227
    %v236 = vadd.f32 %v232, %v20
    %v237 = vadd.f32 %v233, %v21
    %v238 = vrsqrt.pop %v236
    %v239 = vmul.f32 %v238, %v236
    %v240 = vmul.f32 %v239, %v238
    %v241 = vmul.f32 0.5, %v240
    %v242 = vsub.f32 1.5, %v241
    %v243 = vmul.f32 %v238, %v242
    %vm244 = vweird.f32 %v236
    %vm245 = vweird.f32 %v238
    %vm246 = vmor %vm244, %vm245
    %v247 = vsel %vm246, %v238, %v243
    %v248 = vrsqrt.pop %v237
    %v249 = vmul.f32 %v248, %v237
    %v250 = vmul.f32 %v249, %v248
    %v251 = vmul.f32 0.5, %v250
    %v252 = vsub.f32 1.5, %v251
    %v253 = vmul.f32 %v248, %v252
    %vm254 = vweird.f32 %v237
    %vm255 = vweird.f32 %v248
    %vm256 = vmor %vm254, %vm255
    %v257 = vsel %vm256, %v248, %v253
    %v258 = vmul.f32 %v234, %v247
    %v259 = vmul.f32 %v235, %v257
    %v260 = vmax.f32 %v259, 0.0
    %vm261 = vcmp.ge.f32.partialorder %v258, 0.0
    %v262 = vmul.f32 %v258, 0.2
    %v263 = vsel %vm261, %v258, %v262
    %v264 = vmul.f32 %v263, %v260
    %s265 = scalar_lea.vmem [#allocation2], 16
    %266 = vst.msk [vmem:[%s265] sm:$0xff] %vm93, %v264
    %267 = vst.msk [vmem:[%s265 + $0x8] sm:$0xff] %vm93, %v260
    // Predicated region
    $region10: #{tpu_custom_call.1} parent=1 // pred_check
      _
    $region11: #{tpu_custom_call.1} parent=1 // pred_check_branch
      %269 = sbr.rel (0) target = $region13
    $region12: #{tpu_custom_call.1} parent=1 // pred_region
      %271 = vsyncadd [#allocation3], 0
      %s272 = sshll.u32 [#allocation2], 4
      %s273 = int_to_ptr.vmem [resolvable:$true] %s272
      %s274 = sshll.u32 %s2, 4
      %s275 = int_to_ptr.hbm [resolvable:$true] %s274
      %280 = dma.vmem_to_hbm [thread:$0]  %s273, 512, %s275, [#allocation3], 128, 128, 8
    $region13: #{tpu_custom_call.1} parent=1 // pred_fallthru
      _
    // Predicated region
    $region14: #{tpu_custom_call.1} parent=1 // pred_check
      _
    $region15: #{tpu_custom_call.1} parent=1 // pred_check_branch
      %282 = sbr.rel (0) target = $region17
    $region16: #{tpu_custom_call.1} parent=1 // pred_region
      %284 = dma.done [#allocation3], 512
    $region17: #{tpu_custom_call.1} parent=1 // pred_fallthru
      _
    %285 = vsyncpa [#allocation3], 1

</llo_original>
